<compile_context>
chip_gen: v5e
topology: v5e:2x2
jax: 0.10.0
libtpu: 0.0.40
codegen_flags: <defaults>
</compile_context>

<pallas_src>
import jax
import jax.numpy as jnp
from jax import lax
from jax.experimental import pallas as pl
from jax.experimental.pallas import tpu as pltpu

_LANE = 128
_SUBLANE = 8


def _round_up(x, m):
    return ((x + m - 1) // m) * m


def _tile_config():
    """(batch tile size, force >=2 grid tiles) for the local TPU generation."""
    try:
        kind = jax.devices()[0].device_kind.lower()
    except Exception:
        kind = ""
    is_v5 = "v5" in kind
    is_v7 = "v7" in kind
    block_b = 128 if is_v5 else 256          # v6e/v7x MXU is 256-wide in M
    return block_b, is_v7                    # v7x: 2 TCs -> want >=2 parallel tiles


def cnn_fused_kernel(text_ref, wf_ref, b1_ref, w2_ref, b2_ref, o_ref):
    """One batch tile: (gather+fc1 fused matmul) + relu + fc2 + softmax in VMEM."""
    tb, seq_len = text_ref.shape            # (TB, L) int32 token ids
    lv = wf_ref.shape[0]                    # L * V
    vocab = lv // seq_len
    out_dim = o_ref.shape[1]                # real number of classes (unpadded)

    # One-hot over the fused (position, token) axis: col l*V + txt[:, l] is 1.
    txt = text_ref[...]
    keys = txt + lax.broadcasted_iota(jnp.int32, (tb, seq_len), 1) * vocab
    col_iota = lax.broadcasted_iota(jnp.int32, (tb, lv), 1)
    hit = col_iota == keys[:, 0:1]
    for l in range(1, seq_len):                                   # static, L small
        hit = hit | (col_iota == keys[:, l:l + 1])
    onehot = hit.astype(jnp.bfloat16)                             # exact in bf16

    # Fused embedding-gather + fc1: ONE (TB, L*V) @ (L*V, Hp) bf16 MXU matmul.
    h = jnp.dot(onehot, wf_ref[...], preferred_element_type=jnp.float32)
    h = jnp.maximum(h + b1_ref[...], 0.0)                         # fc1 bias + relu (f32)
    # dropout: identity at inference time
    # TODO(synk): training-mode stochastic dropout not implemented (eval semantics)

    logits = jnp.dot(h.astype(jnp.bfloat16), w2_ref[...],
                     preferred_element_type=jnp.float32) + b2_ref[...]   # (TB, Op)
    lg = logits[:, :out_dim]                                      # real classes only
    m = jnp.max(lg, axis=-1, keepdims=True)
    e = jnp.exp(lg - m)
    s = jnp.sum(e, axis=-1, keepdims=True)
    o_ref[...] = e * pl.reciprocal(s, approx=True)                # EUP slot, co-issues


def prepare_params(emb_table, w1, b1, w2, b2):
    """One-time (per parameter set) padding + embedding/fc1 fusion + bf16 cast."""
    V, E = emb_table.shape
    D, H = w1.shape
    L = D // E
    O = w2.shape[1]
    Hp = _round_up(H, _LANE)
    Op = _round_up(O, _LANE)

    w1p = jnp.zeros((D, Hp), jnp.float32).at[:, :H].set(w1.astype(jnp.float32))
    # Wf[l*V + v, :] = emb[v] @ w1[l*E:(l+1)*E, :]   (fusion done in f32, stored bf16)
    wf = jnp.einsum('ve,leh->lvh', emb_table.astype(jnp.float32),
                    w1p.reshape(L, E, Hp)).reshape(L * V, Hp)
    b1p = jnp.zeros((1, Hp), jnp.float32).at[0, :H].set(b1.astype(jnp.float32))
    w2p = jnp.zeros((Hp, Op), jnp.float32).at[:H, :O].set(w2.astype(jnp.float32))
    b2p = jnp.zeros((1, Op), jnp.float32).at[0, :O].set(b2.astype(jnp.float32))

    # TODO(synk): for production-sized vocab keep the raw embedding table in HBM
    # (memory_space=pl.ANY) with scalar-prefetched token ids + double-buffered
    # make_async_copy row gathers; the one-hot fusion is O(B*L*V) and only makes
    # sense for tiny vocabularies like this module's.
    return dict(
        wf=wf.astype(jnp.bfloat16),      # bf16 MXU operand, (L*V, Hp)
        b1=b1p,                          # f32 (1, Hp)
        w2=w2p.astype(jnp.bfloat16),     # bf16 (Hp, Op)
        b2=b2p,                          # f32 (1, Op)
        seq_len=L, vocab=V, out_dim=O,
    )


def cnn_forward(text, params):
    """Pallas implementation of ConvolutionalNeuralNetwork.forward (inference)."""
    B, L = text.shape
    assert L == params["seq_len"]
    O = params["out_dim"]
    wf, b1, w2, b2 = params["wf"], params["b1"], params["w2"], params["b2"]
    LV, Hp = wf.shape
    Op = w2.shape[1]

    block_b, want_two_tiles = _tile_config()
    if B > block_b:
        TB = block_b
    elif want_two_tiles and B > _SUBLANE:
        TB = _round_up(pl.cdiv(B, 2), _SUBLANE)   # v7x: keep both TCs busy
    else:
        TB = _round_up(max(B, 1), _SUBLANE)
    n_tiles = pl.cdiv(B, TB)
    Bp = n_tiles * TB

    text_i32 = text.astype(jnp.int32)
    if Bp != B:
        text_i32 = jnp.zeros((Bp, L), jnp.int32).at[:B].set(text_i32)

    out = pl.pallas_call(
        cnn_fused_kernel,
        out_shape=jax.ShapeDtypeStruct((Bp, O), jnp.float32),
        grid_spec=pltpu.PrefetchScalarGridSpec(
            num_scalar_prefetch=0,
            grid=(n_tiles,),
            in_specs=[
                pl.BlockSpec((TB, L), lambda i: (i, 0)),    # token ids (per tile)
                pl.BlockSpec((LV, Hp), lambda i: (0, 0)),   # fused emb*fc1 (resident)
                pl.BlockSpec((1, Hp), lambda i: (0, 0)),    # fc1 bias
                pl.BlockSpec((Hp, Op), lambda i: (0, 0)),   # fc2 weight (resident)
                pl.BlockSpec((1, Op), lambda i: (0, 0)),    # fc2 bias
            ],
            out_specs=pl.BlockSpec((TB, O), lambda i: (i, 0)),  # only real O columns
        ),
        compiler_params=pltpu.CompilerParams(
            dimension_semantics=("parallel",)),             # batch tiles independent
    )(text_i32, wf, b1, w2, b2)

    return out if Bp == B else out[:B]


if __name__ == "__main__":
    # Module hyperparameters (small, consistent with the forward pass)
    vocab_size = 32
    embedding_dim = 16
    hidden_dim = 32
    output_dim = 8
    max_length = 8
    seq_len = 2 * max_length                   # text is (B, 2*max_length)
    in_dim = seq_len * embedding_dim           # 2*max_length*embedding_dim

    key = jax.random.PRNGKey(0)
    k_emb, k_w1, k_b1, k_w2, k_b2, k_txt = jax.random.split(key, 6)

    emb_table = jax.random.normal(k_emb, (vocab_size, embedding_dim), jnp.float32) * 0.1
    emb_table = emb_table.at[0].set(0.0)       # padding_idx=0
    w1 = jax.random.normal(k_w1, (in_dim, hidden_dim), jnp.float32) * 0.05
    b1 = jax.random.normal(k_b1, (hidden_dim,), jnp.float32) * 0.05
    w2 = jax.random.normal(k_w2, (hidden_dim, output_dim), jnp.float32) * 0.05
    b2 = jax.random.normal(k_b2, (output_dim,), jnp.float32) * 0.05

    params = prepare_params(emb_table, w1, b1, w2, b2)   # hoisted: once per param set

    def reference(text):
        e = jnp.take(emb_table, text, axis=0).reshape(text.shape[0], -1)
        h = jnp.maximum(e @ w1 + b1, 0.0)
        return jax.nn.softmax(h @ w2 + b2, axis=1)

    # Tiny spec-sized batch + a larger batch that exercises the tiled grid.
    for batch in (2, 512):
        txt = jax.random.randint(jax.random.fold_in(k_txt, batch),
                                 (batch, seq_len), 0, vocab_size, jnp.int32)
        out = jax.block_until_ready(cnn_forward(txt, params))
        ref = reference(txt)
        assert out.shape == (batch, output_dim)
        # bf16 MXU operands + approx reciprocal in the softmax -> relaxed tolerance
        assert jnp.allclose(out, ref, atol=1e-2, rtol=1e-2), \
            float(jnp.max(jnp.abs(out - ref)))
        assert jnp.allclose(jnp.sum(out, axis=1), 1.0, atol=3e-3)

    print("KERNEL_OK")
</pallas_src>

<mosaic_0001>
module attributes {stable_mosaic.version = 11 : i64} {
  func.func @cnn_fused_kernel(%arg0: i32, %arg1: memref<8x16xi32, #tpu.memory_space<vmem>>, %arg2: memref<512x128xbf16, #tpu.memory_space<vmem>>, %arg3: memref<1x128xf32, #tpu.memory_space<vmem>>, %arg4: memref<128x128xbf16, #tpu.memory_space<vmem>>, %arg5: memref<1x128xf32, #tpu.memory_space<vmem>>, %arg6: memref<8x8xf32, #tpu.memory_space<vmem>>) attributes {dimension_semantics = [#tpu.dimension_semantics<parallel>], iteration_bounds = array<i64: 1>, scalar_prefetch = 0 : i64, scratch_operands = 0 : i64, tpu.core_type = #tpu.core_type<tc>, window_params = [{transform_indices = @transform_0, window_bounds = array<i64: 8, 16>}, {pipeline_mode = #tpu.pipeline_mode<synchronous>, transform_indices = @transform_1, window_bounds = array<i64: 512, 128>}, {pipeline_mode = #tpu.pipeline_mode<synchronous>, transform_indices = @transform_2, window_bounds = array<i64: 1, 128>}, {pipeline_mode = #tpu.pipeline_mode<synchronous>, transform_indices = @transform_3, window_bounds = array<i64: 128, 128>}, {pipeline_mode = #tpu.pipeline_mode<synchronous>, transform_indices = @transform_4, window_bounds = array<i64: 1, 128>}, {transform_indices = @transform_5, window_bounds = array<i64: 8, 8>}]} {
    %c0 = arith.constant 0 : index
    %c0_0 = arith.constant 0 : index
    %0 = vector.load %arg1[%c0, %c0_0] : memref<8x16xi32, #tpu.memory_space<vmem>>, vector<8x16xi32>
    %1 = tpu.iota {dimensions = array<i32: 1>} : vector<8x16xi32>
    %c32_i32 = arith.constant 32 : i32
    %2 = vector.broadcast %c32_i32 : i32 to vector<8x16xi32>
    %3 = arith.muli %1, %2 : vector<8x16xi32>
    %4 = arith.addi %0, %3 : vector<8x16xi32>
    %5 = tpu.iota {dimensions = array<i32: 1>} : vector<8x512xi32>
    %6 = vector.extract_strided_slice %4 {offsets = [0, 0], sizes = [8, 1], strides = [1, 1]} : vector<8x16xi32> to vector<8x1xi32>
    %7 = vector.broadcast %6 : vector<8x1xi32> to vector<8x512xi32>
    %8 = arith.cmpi eq, %5, %7 : vector<8x512xi32>
    %9 = vector.extract_strided_slice %4 {offsets = [0, 1], sizes = [8, 1], strides = [1, 1]} : vector<8x16xi32> to vector<8x1xi32>
    %10 = vector.broadcast %9 : vector<8x1xi32> to vector<8x512xi32>
    %11 = arith.cmpi eq, %5, %10 : vector<8x512xi32>
    %12 = arith.ori %8, %11 : vector<8x512xi1>
    %13 = vector.extract_strided_slice %4 {offsets = [0, 2], sizes = [8, 1], strides = [1, 1]} : vector<8x16xi32> to vector<8x1xi32>
    %14 = vector.broadcast %13 : vector<8x1xi32> to vector<8x512xi32>
    %15 = arith.cmpi eq, %5, %14 : vector<8x512xi32>
    %16 = arith.ori %12, %15 : vector<8x512xi1>
    %17 = vector.extract_strided_slice %4 {offsets = [0, 3], sizes = [8, 1], strides = [1, 1]} : vector<8x16xi32> to vector<8x1xi32>
    %18 = vector.broadcast %17 : vector<8x1xi32> to vector<8x512xi32>
    %19 = arith.cmpi eq, %5, %18 : vector<8x512xi32>
    %20 = arith.ori %16, %19 : vector<8x512xi1>
    %21 = vector.extract_strided_slice %4 {offsets = [0, 4], sizes = [8, 1], strides = [1, 1]} : vector<8x16xi32> to vector<8x1xi32>
    %22 = vector.broadcast %21 : vector<8x1xi32> to vector<8x512xi32>
    %23 = arith.cmpi eq, %5, %22 : vector<8x512xi32>
    %24 = arith.ori %20, %23 : vector<8x512xi1>
    %25 = vector.extract_strided_slice %4 {offsets = [0, 5], sizes = [8, 1], strides = [1, 1]} : vector<8x16xi32> to vector<8x1xi32>
    %26 = vector.broadcast %25 : vector<8x1xi32> to vector<8x512xi32>
    %27 = arith.cmpi eq, %5, %26 : vector<8x512xi32>
    %28 = arith.ori %24, %27 : vector<8x512xi1>
    %29 = vector.extract_strided_slice %4 {offsets = [0, 6], sizes = [8, 1], strides = [1, 1]} : vector<8x16xi32> to vector<8x1xi32>
    %30 = vector.broadcast %29 : vector<8x1xi32> to vector<8x512xi32>
    %31 = arith.cmpi eq, %5, %30 : vector<8x512xi32>
    %32 = arith.ori %28, %31 : vector<8x512xi1>
    %33 = vector.extract_strided_slice %4 {offsets = [0, 7], sizes = [8, 1], strides = [1, 1]} : vector<8x16xi32> to vector<8x1xi32>
    %34 = vector.broadcast %33 : vector<8x1xi32> to vector<8x512xi32>
    %35 = arith.cmpi eq, %5, %34 : vector<8x512xi32>
    %36 = arith.ori %32, %35 : vector<8x512xi1>
    %37 = vector.extract_strided_slice %4 {offsets = [0, 8], sizes = [8, 1], strides = [1, 1]} : vector<8x16xi32> to vector<8x1xi32>
    %38 = vector.broadcast %37 : vector<8x1xi32> to vector<8x512xi32>
    %39 = arith.cmpi eq, %5, %38 : vector<8x512xi32>
    %40 = arith.ori %36, %39 : vector<8x512xi1>
    %41 = vector.extract_strided_slice %4 {offsets = [0, 9], sizes = [8, 1], strides = [1, 1]} : vector<8x16xi32> to vector<8x1xi32>
    %42 = vector.broadcast %41 : vector<8x1xi32> to vector<8x512xi32>
    %43 = arith.cmpi eq, %5, %42 : vector<8x512xi32>
    %44 = arith.ori %40, %43 : vector<8x512xi1>
    %45 = vector.extract_strided_slice %4 {offsets = [0, 10], sizes = [8, 1], strides = [1, 1]} : vector<8x16xi32> to vector<8x1xi32>
    %46 = vector.broadcast %45 : vector<8x1xi32> to vector<8x512xi32>
    %47 = arith.cmpi eq, %5, %46 : vector<8x512xi32>
    %48 = arith.ori %44, %47 : vector<8x512xi1>
    %49 = vector.extract_strided_slice %4 {offsets = [0, 11], sizes = [8, 1], strides = [1, 1]} : vector<8x16xi32> to vector<8x1xi32>
    %50 = vector.broadcast %49 : vector<8x1xi32> to vector<8x512xi32>
    %51 = arith.cmpi eq, %5, %50 : vector<8x512xi32>
    %52 = arith.ori %48, %51 : vector<8x512xi1>
    %53 = vector.extract_strided_slice %4 {offsets = [0, 12], sizes = [8, 1], strides = [1, 1]} : vector<8x16xi32> to vector<8x1xi32>
    %54 = vector.broadcast %53 : vector<8x1xi32> to vector<8x512xi32>
    %55 = arith.cmpi eq, %5, %54 : vector<8x512xi32>
    %56 = arith.ori %52, %55 : vector<8x512xi1>
    %57 = vector.extract_strided_slice %4 {offsets = [0, 13], sizes = [8, 1], strides = [1, 1]} : vector<8x16xi32> to vector<8x1xi32>
    %58 = vector.broadcast %57 : vector<8x1xi32> to vector<8x512xi32>
    %59 = arith.cmpi eq, %5, %58 : vector<8x512xi32>
    %60 = arith.ori %56, %59 : vector<8x512xi1>
    %61 = vector.extract_strided_slice %4 {offsets = [0, 14], sizes = [8, 1], strides = [1, 1]} : vector<8x16xi32> to vector<8x1xi32>
    %62 = vector.broadcast %61 : vector<8x1xi32> to vector<8x512xi32>
    %63 = arith.cmpi eq, %5, %62 : vector<8x512xi32>
    %64 = arith.ori %60, %63 : vector<8x512xi1>
    %65 = vector.extract_strided_slice %4 {offsets = [0, 15], sizes = [8, 1], strides = [1, 1]} : vector<8x16xi32> to vector<8x1xi32>
    %66 = vector.broadcast %65 : vector<8x1xi32> to vector<8x512xi32>
    %67 = arith.cmpi eq, %5, %66 : vector<8x512xi32>
    %68 = arith.ori %64, %67 : vector<8x512xi1>
    %69 = arith.extui %68 : vector<8x512xi1> to vector<8x512xi32>
    %70 = arith.sitofp %69 : vector<8x512xi32> to vector<8x512xf32>
    %71 = arith.truncf %70 : vector<8x512xf32> to vector<8x512xbf16>
    %c0_1 = arith.constant 0 : index
    %c0_2 = arith.constant 0 : index
    %72 = vector.load %arg2[%c0_1, %c0_2] : memref<512x128xbf16, #tpu.memory_space<vmem>>, vector<512x128xbf16>
    %cst = arith.constant dense<0.000000e+00> : vector<8x128xf32>
    %73 = tpu.matmul %71, %72, %cst {dimension_numbers = #tpu.dot_dimension_numbers<[1], [0], [0], [1], [0, 0, 1, 1], [], []>} : vector<8x512xbf16>, vector<512x128xbf16>, vector<8x128xf32> -> vector<8x128xf32>
    %c0_3 = arith.constant 0 : index
    %c0_4 = arith.constant 0 : index
    %74 = vector.load %arg3[%c0_3, %c0_4] : memref<1x128xf32, #tpu.memory_space<vmem>>, vector<1x128xf32>
    %75 = vector.broadcast %74 : vector<1x128xf32> to vector<8x128xf32>
    %76 = arith.addf %73, %75 : vector<8x128xf32>
    %cst_5 = arith.constant 0.000000e+00 : f32
    %77 = vector.broadcast %cst_5 : f32 to vector<8x128xf32>
    %78 = arith.maximumf %76, %77 : vector<8x128xf32>
    %79 = arith.truncf %78 : vector<8x128xf32> to vector<8x128xbf16>
    %c0_6 = arith.constant 0 : index
    %c0_7 = arith.constant 0 : index
    %80 = vector.load %arg4[%c0_6, %c0_7] : memref<128x128xbf16, #tpu.memory_space<vmem>>, vector<128x128xbf16>
    %cst_8 = arith.constant dense<0.000000e+00> : vector<8x128xf32>
    %81 = tpu.matmul %79, %80, %cst_8 {dimension_numbers = #tpu.dot_dimension_numbers<[1], [0], [0], [1], [0, 0, 1, 1], [], []>} : vector<8x128xbf16>, vector<128x128xbf16>, vector<8x128xf32> -> vector<8x128xf32>
    %c0_9 = arith.constant 0 : index
    %c0_10 = arith.constant 0 : index
    %82 = vector.load %arg5[%c0_9, %c0_10] : memref<1x128xf32, #tpu.memory_space<vmem>>, vector<1x128xf32>
    %83 = vector.broadcast %82 : vector<1x128xf32> to vector<8x128xf32>
    %84 = arith.addf %81, %83 : vector<8x128xf32>
    %85 = vector.extract_strided_slice %84 {offsets = [0, 0], sizes = [8, 8], strides = [1, 1]} : vector<8x128xf32> to vector<8x8xf32>
    %cst_11 = arith.constant dense<0xFF800000> : vector<8xf32>
    %86 = vector.multi_reduction <maximumf>, %85, %cst_11 [1] : vector<8x8xf32> to vector<8xf32>
    %87 = vector.shape_cast %86 : vector<8xf32> to vector<8x1xf32>
    %88 = vector.broadcast %87 : vector<8x1xf32> to vector<8x8xf32>
    %89 = arith.subf %85, %88 : vector<8x8xf32>
    %90 = math.exp %89 : vector<8x8xf32>
    %cst_12 = arith.constant dense<0.000000e+00> : vector<8xf32>
    %91 = vector.multi_reduction <add>, %90, %cst_12 [1] : vector<8x8xf32> to vector<8xf32>
    %92 = vector.shape_cast %91 : vector<8xf32> to vector<8x1xf32>
    %93 = tpu.reciprocal %92 {approx = true} : vector<8x1xf32> -> vector<8x1xf32>
    %94 = vector.broadcast %93 : vector<8x1xf32> to vector<8x8xf32>
    %95 = arith.mulf %90, %94 : vector<8x8xf32>
    %c0_13 = arith.constant 0 : index
    %c0_14 = arith.constant 0 : index
    %96 = vector.load %arg6[%c0_13, %c0_14] : memref<8x8xf32, #tpu.memory_space<vmem>>, vector<8x8xf32>
    tpu.vector_store %arg6[%c0_13, %c0_14], %95 {strides = array<i32>} : memref<8x8xf32, #tpu.memory_space<vmem>>, vector<8x8xf32>,
    return
  }
  func.func @transform_0(%arg0: i32) -> (i32, i32) {
    %c0_i32 = arith.constant 0 : i32
    %c0_i32_0 = arith.constant 0 : i32
    return %arg0, %c0_i32 : i32, i32
  }
  func.func @transform_1(%arg0: i32) -> (i32, i32) {
    %c0_i32 = arith.constant 0 : i32
    %c0_i32_0 = arith.constant 0 : i32
    %c0_i32_1 = arith.constant 0 : i32
    return %c0_i32, %c0_i32_0 : i32, i32
  }
  func.func @transform_2(%arg0: i32) -> (i32, i32) {
    %c0_i32 = arith.constant 0 : i32
    %c0_i32_0 = arith.constant 0 : i32
    %c0_i32_1 = arith.constant 0 : i32
    return %c0_i32, %c0_i32_0 : i32, i32
  }
  func.func @transform_3(%arg0: i32) -> (i32, i32) {
    %c0_i32 = arith.constant 0 : i32
    %c0_i32_0 = arith.constant 0 : i32
    %c0_i32_1 = arith.constant 0 : i32
    return %c0_i32, %c0_i32_0 : i32, i32
  }
  func.func @transform_4(%arg0: i32) -> (i32, i32) {
    %c0_i32 = arith.constant 0 : i32
    %c0_i32_0 = arith.constant 0 : i32
    %c0_i32_1 = arith.constant 0 : i32
    return %c0_i32, %c0_i32_0 : i32, i32
  }
  func.func @transform_5(%arg0: i32) -> (i32, i32) {
    %c0_i32 = arith.constant 0 : i32
    %c0_i32_0 = arith.constant 0 : i32
    return %arg0, %c0_i32 : i32, i32
  }
}

</mosaic_0001>

<llo_original>
// kernel: tpu_custom_call.1
$region0: #{tpu_custom_call.1}
  #allocation0 [shape = 'u32[]', space=smem, size = 0x4, offset = 0x4, fixed_abs, tag = 'smem constant byte address 0x4 - core index']
  #allocation1 [shape = 'u32[72,128]{1,0:T(1,128)}', space=vmem, size = 0x9000, scoped, tag = 'internal scratch']
  %s0 = inlined_call_operand.hbm [shape: s32[8,16], index: 0, kind: input, shape index: {}]
  %s1 = inlined_call_operand.hbm [shape: bf16[512,128], index: 1, kind: input, shape index: {}]
  %s2 = inlined_call_operand.vmem [shape: f32[1,128], index: 2, kind: input, shape index: {}]
  %s3 = inlined_call_operand.hbm [shape: bf16[128,128], index: 3, kind: input, shape index: {}]
  %s4 = inlined_call_operand.vmem [shape: f32[1,128], index: 4, kind: input, shape index: {}]
  %s5 = inlined_call_operand.hbm [shape: f32[8,8], index: 5, kind: output, shape index: {}]
  %s6 = sld [smem:[#allocation0]]
  $region42: #{tpu_custom_call.1} parent=0
    _
  %s8 = ssub.s32 1, %s6
  %s9 = scalar_select 0, %s8, %s6
  $region1: #{tpu_custom_call.1} parent=0
    #allocation2 [shape = 'u8[4096]{0}', space=vmem, size = 0x1000, scoped, tag = 'input window, operand 0, single buffered']
    #allocation3 [shape = 's32[1]{0}', space=sflag, size = 0x4, scoped, tag = 'scoped memory for tpu_custom_call.1']
    #allocation4 [shape = 's32[1]{0}', space=sflag, size = 0x4, scoped, tag = 'scoped memory for tpu_custom_call.1']
    #allocation5 [shape = 'u8[131072]{0}', space=vmem, size = 0x20000, scoped, tag = 'input window, operand 1, single buffered']
    #allocation6 [shape = 's32[1]{0}', space=sflag, size = 0x4, scoped, tag = 'scoped memory for tpu_custom_call.1']
    #allocation7 [shape = 'u8[32768]{0}', space=vmem, size = 0x8000, scoped, tag = 'input window, operand 3, single buffered']
    #allocation8 [shape = 'u8[4096]{0}', space=vmem, size = 0x1000, scoped, tag = 'output window, operand 0, single buffered']
    %10 = vsyncpa [#allocation3], 0
    %11 = vsyncpa [#allocation6], 0
    %12 = vsyncpa [#allocation4], 0
    // Predicated region
    $region2: #{tpu_custom_call.1} parent=1 // pred_check
      _
    $region3: #{tpu_custom_call.1} parent=1 // pred_check_branch
      %14 = sbr.rel (0) target = $region5
    $region4: #{tpu_custom_call.1} parent=1 // pred_region
      %16 = vsyncadd [#allocation3], 0
      %s18 = sshll.u32 %s0, 4
      %s19 = int_to_ptr.hbm [resolvable:$true] %s18
      %s20 = sshll.u32 [#allocation2], 4
      %s21 = int_to_ptr.vmem [resolvable:$true] %s20
      %23 = dma.hbm_to_vmem [thread:$0]  %s19, 128, %s21, [#allocation3]
    $region5: #{tpu_custom_call.1} parent=1 // pred_fallthru
      _
    // Predicated region
    $region6: #{tpu_custom_call.1} parent=1 // pred_check
      _
    $region7: #{tpu_custom_call.1} parent=1 // pred_check_branch
      %25 = sbr.rel (0) target = $region9
    $region8: #{tpu_custom_call.1} parent=1 // pred_region
      %27 = vsyncadd [#allocation6], 0
      %s28 = sshll.u32 %s1, 4
      %s29 = int_to_ptr.hbm [resolvable:$true] %s28
      %s30 = sshll.u32 [#allocation5], 4
      %s31 = int_to_ptr.vmem [resolvable:$true] %s30
      %36 = dma.hbm_to_vmem [thread:$0]  %s29, 4096, %s31, [#allocation6], 64, 64, 4
    $region9: #{tpu_custom_call.1} parent=1 // pred_fallthru
      _
    // Predicated region
    $region10: #{tpu_custom_call.1} parent=1 // pred_check
      _
    $region11: #{tpu_custom_call.1} parent=1 // pred_check_branch
      %38 = sbr.rel (0) target = $region13
    $region12: #{tpu_custom_call.1} parent=1 // pred_region
      _
    $region13: #{tpu_custom_call.1} parent=1 // pred_fallthru
      _
    // Predicated region
    $region14: #{tpu_custom_call.1} parent=1 // pred_check
      _
    $region15: #{tpu_custom_call.1} parent=1 // pred_check_branch
      %40 = sbr.rel (0) target = $region17
    $region16: #{tpu_custom_call.1} parent=1 // pred_region
      %42 = vsyncadd [#allocation6], 0
      %s43 = sshll.u32 %s3, 4
      %s44 = int_to_ptr.hbm [resolvable:$true] %s43
      %s45 = sshll.u32 [#allocation7], 4
      %s46 = int_to_ptr.vmem [resolvable:$true] %s45
      %51 = dma.hbm_to_vmem [thread:$0]  %s44, 1024, %s46, [#allocation6], 64, 64, 4
    $region17: #{tpu_custom_call.1} parent=1 // pred_fallthru
      _
    // Predicated region
    $region18: #{tpu_custom_call.1} parent=1 // pred_check
      _
    $region19: #{tpu_custom_call.1} parent=1 // pred_check_branch
      %53 = sbr.rel (0) target = $region21
    $region20: #{tpu_custom_call.1} parent=1 // pred_region
      _
    $region21: #{tpu_custom_call.1} parent=1 // pred_fallthru
      _
    // Predicated region
    $region22: #{tpu_custom_call.1} parent=1 // pred_check
      _
    $region23: #{tpu_custom_call.1} parent=1 // pred_check_branch
      %55 = sbr.rel (0) target = $region25
    $region24: #{tpu_custom_call.1} parent=1 // pred_region
      %57 = dma.done [#allocation3], 128
    $region25: #{tpu_custom_call.1} parent=1 // pred_fallthru
      _
    // Predicated region
    $region26: #{tpu_custom_call.1} parent=1 // pred_check
      _
    $region27: #{tpu_custom_call.1} parent=1 // pred_check_branch
      %59 = sbr.rel (0) target = $region29
    $region28: #{tpu_custom_call.1} parent=1 // pred_region
      %61 = dma.done [#allocation6], 4096
    $region29: #{tpu_custom_call.1} parent=1 // pred_fallthru
      _
    // Predicated region
    $region30: #{tpu_custom_call.1} parent=1 // pred_check
      _
    $region31: #{tpu_custom_call.1} parent=1 // pred_check_branch
      %63 = sbr.rel (0) target = $region33
    $region32: #{tpu_custom_call.1} parent=1 // pred_region
      %65 = dma.done [#allocation6], 1024
    $region33: #{tpu_custom_call.1} parent=1 // pred_fallthru
      _
    %v66 = vld [vmem:[#allocation2] sm:$0xff]
    %v67 = vlaneseq
    %v68 = vand.u32 %v67, 127
    %v69 = vmul.u32 %v68, 32
    %v70 = vadd.s32 %v66, %v69
    %v71 = vadd.s32 %v68, 128
    %v72 = vadd.s32 %v68, 256
    %v73 = vadd.s32 %v68, 384
    %74 = vset.pattern.permute.xlu0 0
    %75 = vperm.xlu0 %74, %v70
    %v76 = vpop.permute.xlu0 %75
    %vm77 = vcmp.eq.s32.totalorder %v68, %v76
    %vm78 = vcmp.eq.s32.totalorder %v71, %v76
    %vm79 = vcmp.eq.s32.totalorder %v72, %v76
    %vm80 = vcmp.eq.s32.totalorder %v73, %v76
    %81 = vset.pattern.permute.xlu0 1
    %82 = vperm.xlu0 %81, %v70
    %v83 = vpop.permute.xlu0 %82
    %vm84 = vcmp.eq.s32.totalorder %v68, %v83
    %vm85 = vcmp.eq.s32.totalorder %v71, %v83
    %vm86 = vcmp.eq.s32.totalorder %v72, %v83
    %vm87 = vcmp.eq.s32.totalorder %v73, %v83
    %vm88 = vmor %vm77, %vm84
    %vm89 = vmor %vm78, %vm85
    %vm90 = vmor %vm79, %vm86
    %vm91 = vmor %vm80, %vm87
    %92 = vset.pattern.permute.xlu0 2
    %93 = vperm.xlu0 %92, %v70
    %v94 = vpop.permute.xlu0 %93
    %vm95 = vcmp.eq.s32.totalorder %v68, %v94
    %vm96 = vcmp.eq.s32.totalorder %v71, %v94
    %vm97 = vcmp.eq.s32.totalorder %v72, %v94
    %vm98 = vcmp.eq.s32.totalorder %v73, %v94
    %vm99 = vmor %vm88, %vm95
    %vm100 = vmor %vm89, %vm96
    %vm101 = vmor %vm90, %vm97
    %vm102 = vmor %vm91, %vm98
    %103 = vset.pattern.permute.xlu0 3
    %104 = vperm.xlu0 %103, %v70
    %v105 = vpop.permute.xlu0 %104
    %vm106 = vcmp.eq.s32.totalorder %v68, %v105
    %vm107 = vcmp.eq.s32.totalorder %v71, %v105
    %vm108 = vcmp.eq.s32.totalorder %v72, %v105
    %vm109 = vcmp.eq.s32.totalorder %v73, %v105
    %vm110 = vmor %vm99, %vm106
    %vm111 = vmor %vm100, %vm107
    %vm112 = vmor %vm101, %vm108
    %vm113 = vmor %vm102, %vm109
    %114 = vset.pattern.permute.xlu0 4
    %115 = vperm.xlu0 %114, %v70
    %v116 = vpop.permute.xlu0 %115
    %vm117 = vcmp.eq.s32.totalorder %v68, %v116
    %vm118 = vcmp.eq.s32.totalorder %v71, %v116
    %vm119 = vcmp.eq.s32.totalorder %v72, %v116
    %vm120 = vcmp.eq.s32.totalorder %v73, %v116
    %vm121 = vmor %vm110, %vm117
    %vm122 = vmor %vm111, %vm118
    %vm123 = vmor %vm112, %vm119
    %vm124 = vmor %vm113, %vm120
    %125 = vset.pattern.permute.xlu0 5
    %126 = vperm.xlu0 %125, %v70
    %v127 = vpop.permute.xlu0 %126
    %vm128 = vcmp.eq.s32.totalorder %v68, %v127
    %vm129 = vcmp.eq.s32.totalorder %v71, %v127
    %vm130 = vcmp.eq.s32.totalorder %v72, %v127
    %vm131 = vcmp.eq.s32.totalorder %v73, %v127
    %vm132 = vmor %vm121, %vm128
    %vm133 = vmor %vm122, %vm129
    %vm134 = vmor %vm123, %vm130
    %vm135 = vmor %vm124, %vm131
    %136 = vset.pattern.permute.xlu0 6
    %137 = vperm.xlu0 %136, %v70
    %v138 = vpop.permute.xlu0 %137
    %vm139 = vcmp.eq.s32.totalorder %v68, %v138
    %vm140 = vcmp.eq.s32.totalorder %v71, %v138
    %vm141 = vcmp.eq.s32.totalorder %v72, %v138
    %vm142 = vcmp.eq.s32.totalorder %v73, %v138
    %vm143 = vmor %vm132, %vm139
    %vm144 = vmor %vm133, %vm140
    %vm145 = vmor %vm134, %vm141
    %vm146 = vmor %vm135, %vm142
    %147 = vset.pattern.permute.xlu0 7
    %148 = vperm.xlu0 %147, %v70
    %v149 = vpop.permute.xlu0 %148
    %vm150 = vcmp.eq.s32.totalorder %v68, %v149
    %vm151 = vcmp.eq.s32.totalorder %v71, %v149
    %vm152 = vcmp.eq.s32.totalorder %v72, %v149
    %vm153 = vcmp.eq.s32.totalorder %v73, %v149
    %vm154 = vmor %vm143, %vm150
    %vm155 = vmor %vm144, %vm151
    %vm156 = vmor %vm145, %vm152
    %vm157 = vmor %vm146, %vm153
    %158 = vset.pattern.permute.xlu0 8
    %159 = vperm.xlu0 %158, %v70
    %v160 = vpop.permute.xlu0 %159
    %vm161 = vcmp.eq.s32.totalorder %v68, %v160
    %vm162 = vcmp.eq.s32.totalorder %v71, %v160
    %vm163 = vcmp.eq.s32.totalorder %v72, %v160
    %vm164 = vcmp.eq.s32.totalorder %v73, %v160
    %vm165 = vmor %vm154, %vm161
    %vm166 = vmor %vm155, %vm162
    %vm167 = vmor %vm156, %vm163
    %vm168 = vmor %vm157, %vm164
    %169 = vset.pattern.permute.xlu0 9
    %170 = vperm.xlu0 %169, %v70
    %v171 = vpop.permute.xlu0 %170
    %vm172 = vcmp.eq.s32.totalorder %v68, %v171
    %vm173 = vcmp.eq.s32.totalorder %v71, %v171
    %vm174 = vcmp.eq.s32.totalorder %v72, %v171
    %vm175 = vcmp.eq.s32.totalorder %v73, %v171
    %vm176 = vmor %vm165, %vm172
    %vm177 = vmor %vm166, %vm173
    %vm178 = vmor %vm167, %vm174
    %vm179 = vmor %vm168, %vm175
    %180 = vset.pattern.permute.xlu0 10
    %181 = vperm.xlu0 %180, %v70
    %v182 = vpop.permute.xlu0 %181
    %vm183 = vcmp.eq.s32.totalorder %v68, %v182
    %vm184 = vcmp.eq.s32.totalorder %v71, %v182
    %vm185 = vcmp.eq.s32.totalorder %v72, %v182
    %vm186 = vcmp.eq.s32.totalorder %v73, %v182
    %vm187 = vmor %vm176, %vm183
    %vm188 = vmor %vm177, %vm184
    %vm189 = vmor %vm178, %vm185
    %vm190 = vmor %vm179, %vm186
    %191 = vset.pattern.permute.xlu0 11
    %192 = vperm.xlu0 %191, %v70
    %v193 = vpop.permute.xlu0 %192
    %vm194 = vcmp.eq.s32.totalorder %v68, %v193
    %vm195 = vcmp.eq.s32.totalorder %v71, %v193
    %vm196 = vcmp.eq.s32.totalorder %v72, %v193
    %vm197 = vcmp.eq.s32.totalorder %v73, %v193
    %vm198 = vmor %vm187, %vm194
    %vm199 = vmor %vm188, %vm195
    %vm200 = vmor %vm189, %vm196
    %vm201 = vmor %vm190, %vm197
    %202 = vset.pattern.permute.xlu0 12
    %203 = vperm.xlu0 %202, %v70
    %v204 = vpop.permute.xlu0 %203
    %vm205 = vcmp.eq.s32.totalorder %v68, %v204
    %vm206 = vcmp.eq.s32.totalorder %v71, %v204
    %vm207 = vcmp.eq.s32.totalorder %v72, %v204
    %vm208 = vcmp.eq.s32.totalorder %v73, %v204
    %vm209 = vmor %vm198, %vm205
    %vm210 = vmor %vm199, %vm206
    %vm211 = vmor %vm200, %vm207
    %vm212 = vmor %vm201, %vm208
    %213 = vset.pattern.permute.xlu0 13
    %214 = vperm.xlu0 %213, %v70
    %v215 = vpop.permute.xlu0 %214
    %vm216 = vcmp.eq.s32.totalorder %v68, %v215
    %vm217 = vcmp.eq.s32.totalorder %v71, %v215
    %vm218 = vcmp.eq.s32.totalorder %v72, %v215
    %vm219 = vcmp.eq.s32.totalorder %v73, %v215
    %vm220 = vmor %vm209, %vm216
    %vm221 = vmor %vm210, %vm217
    %vm222 = vmor %vm211, %vm218
    %vm223 = vmor %vm212, %vm219
    %224 = vset.pattern.permute.xlu0 14
    %225 = vperm.xlu0 %224, %v70
    %v226 = vpop.permute.xlu0 %225
    %vm227 = vcmp.eq.s32.totalorder %v68, %v226
    %vm228 = vcmp.eq.s32.totalorder %v71, %v226
    %vm229 = vcmp.eq.s32.totalorder %v72, %v226
    %vm230 = vcmp.eq.s32.totalorder %v73, %v226
    %vm231 = vmor %vm220, %vm227
    %vm232 = vmor %vm221, %vm228
    %vm233 = vmor %vm222, %vm229
    %vm234 = vmor %vm223, %vm230
    %235 = vset.pattern.permute.xlu0 15
    %236 = vperm.xlu0 %235, %v70
    %v237 = vpop.permute.xlu0 %236
    %vm238 = vcmp.eq.s32.totalorder %v68, %v237
    %vm239 = vcmp.eq.s32.totalorder %v71, %v237
    %vm240 = vcmp.eq.s32.totalorder %v72, %v237
    %vm241 = vcmp.eq.s32.totalorder %v73, %v237
    %vm242 = vmor %vm231, %vm238
    %vm243 = vmor %vm232, %vm239
    %vm244 = vmor %vm233, %vm240
    %vm245 = vmor %vm234, %vm241
    %v246 = vsel %vm242, 1, 0
    %v247 = vsel %vm243, 1, 0
    %v248 = vsel %vm244, 1, 0
    %v249 = vsel %vm245, 1, 0
    %v250 = vcvt.s32.f32 %v246
    %v251 = vcvt.s32.f32 %v247
    %v252 = vcvt.s32.f32 %v248
    %v253 = vcvt.s32.f32 %v249
    %v254 = vpack.c.bf16 %v250, %v250
    %v255 = vpack.c.bf16 %v251, %v251
    %v256 = vpack.c.bf16 %v252, %v252
    %v257 = vpack.c.bf16 %v253, %v253
    %v258 = vld [vmem:[#allocation5] sm:$0xf]
    %v259 = vld [vmem:[#allocation5 + $0x4] sm:$0xf]
    %v260 = vld [vmem:[#allocation5 + $0x8] sm:$0xf]
    %v261 = vld [vmem:[#allocation5 + $0xc] sm:$0xf]
    %v262 = vld [vmem:[#allocation5 + $0x10] sm:$0xf]
    %v263 = vld [vmem:[#allocation5 + $0x14] sm:$0xf]
    %v264 = vld [vmem:[#allocation5 + $0x18] sm:$0xf]
    %v265 = vld [vmem:[#allocation5 + $0x1c] sm:$0xf]
    %v266 = vld [vmem:[#allocation5 + $0x20] sm:$0xf]
    %v267 = vld [vmem:[#allocation5 + $0x24] sm:$0xf]
    %v268 = vld [vmem:[#allocation5 + $0x28] sm:$0xf]
    %v269 = vld [vmem:[#allocation5 + $0x2c] sm:$0xf]
    %v270 = vld [vmem:[#allocation5 + $0x30] sm:$0xf]
    %v271 = vld [vmem:[#allocation5 + $0x34] sm:$0xf]
    %v272 = vld [vmem:[#allocation5 + $0x38] sm:$0xf]
    %v273 = vld [vmem:[#allocation5 + $0x3c] sm:$0xf]
    %v274 = vld [vmem:[#allocation5 + $0x40] sm:$0xf]
    %v275 = vld [vmem:[#allocation5 + $0x44] sm:$0xf]
    %v276 = vld [vmem:[#allocation5 + $0x48] sm:$0xf]
    %v277 = vld [vmem:[#allocation5 + $0x4c] sm:$0xf]
    %v278 = vld [vmem:[#allocation5 + $0x50] sm:$0xf]
    %v279 = vld [vmem:[#allocation5 + $0x54] sm:$0xf]
    %v280 = vld [vmem:[#allocation5 + $0x58] sm:$0xf]
    %v281 = vld [vmem:[#allocation5 + $0x5c] sm:$0xf]
    %v282 = vld [vmem:[#allocation5 + $0x60] sm:$0xf]
    %v283 = vld [vmem:[#allocation5 + $0x64] sm:$0xf]
    %v284 = vld [vmem:[#allocation5 + $0x68] sm:$0xf]
    %v285 = vld [vmem:[#allocation5 + $0x6c] sm:$0xf]
    %v286 = vld [vmem:[#allocation5 + $0x70] sm:$0xf]
    %v287 = vld [vmem:[#allocation5 + $0x74] sm:$0xf]
    %v288 = vld [vmem:[#allocation5 + $0x78] sm:$0xf]
    %v289 = vld [vmem:[#allocation5 + $0x7c] sm:$0xf]
    %v290 = vld [vmem:[#allocation5 + $0x80] sm:$0xf]
    %v291 = vld [vmem:[#allocation5 + $0x84] sm:$0xf]
    %v292 = vld [vmem:[#allocation5 + $0x88] sm:$0xf]
    %v293 = vld [vmem:[#allocation5 + $0x8c] sm:$0xf]
    %v294 = vld [vmem:[#allocation5 + $0x90] sm:$0xf]
    %v295 = vld [vmem:[#allocation5 + $0x94] sm:$0xf]
    %v296 = vld [vmem:[#allocation5 + $0x98] sm:$0xf]
    %v297 = vld [vmem:[#allocation5 + $0x9c] sm:$0xf]
    %v298 = vld [vmem:[#allocation5 + $0xa0] sm:$0xf]
    %v299 = vld [vmem:[#allocation5 + $0xa4] sm:$0xf]
    %v300 = vld [vmem:[#allocation5 + $0xa8] sm:$0xf]
    %v301 = vld [vmem:[#allocation5 + $0xac] sm:$0xf]
    %v302 = vld [vmem:[#allocation5 + $0xb0] sm:$0xf]
    %v303 = vld [vmem:[#allocation5 + $0xb4] sm:$0xf]
    %v304 = vld [vmem:[#allocation5 + $0xb8] sm:$0xf]
    %v305 = vld [vmem:[#allocation5 + $0xbc] sm:$0xf]
    %v306 = vld [vmem:[#allocation5 + $0xc0] sm:$0xf]
    %v307 = vld [vmem:[#allocation5 + $0xc4] sm:$0xf]
    %v308 = vld [vmem:[#allocation5 + $0xc8] sm:$0xf]
    %v309 = vld [vmem:[#allocation5 + $0xcc] sm:$0xf]
    %v310 = vld [vmem:[#allocation5 + $0xd0] sm:$0xf]
    %v311 = vld [vmem:[#allocation5 + $0xd4] sm:$0xf]
    %v312 = vld [vmem:[#allocation5 + $0xd8] sm:$0xf]
    %v313 = vld [vmem:[#allocation5 + $0xdc] sm:$0xf]
    %v314 = vld [vmem:[#allocation5 + $0xe0] sm:$0xf]
    %v315 = vld [vmem:[#allocation5 + $0xe4] sm:$0xf]
    %v316 = vld [vmem:[#allocation5 + $0xe8] sm:$0xf]
    %v317 = vld [vmem:[#allocation5 + $0xec] sm:$0xf]
    %v318 = vld [vmem:[#allocation5 + $0xf0] sm:$0xf]
    %v319 = vld [vmem:[#allocation5 + $0xf4] sm:$0xf]
    %v320 = vld [vmem:[#allocation5 + $0xf8] sm:$0xf]
    %v321 = vld [vmem:[#allocation5 + $0xfc] sm:$0xf]
    %v322 = vld [vmem:[%s2] sm:$0x1]
    %v324 = vperm.slane %v322, 0
    %v390 = vunpack.c.l.b16 %v258
    %v391 = vunpack.c.l.b16 %v259
    %v392 = vunpack.c.l.b16 %v260
    %v393 = vunpack.c.l.b16 %v261
    %v394 = vunpack.c.l.b16 %v262
    %v395 = vunpack.c.l.b16 %v263
    %v396 = vunpack.c.l.b16 %v264
    %v397 = vunpack.c.l.b16 %v265
    %v398 = vunpack.c.l.b16 %v266
    %v399 = vunpack.c.l.b16 %v267
    %v400 = vunpack.c.l.b16 %v268
    %v401 = vunpack.c.l.b16 %v269
    %v402 = vunpack.c.l.b16 %v270
    %v403 = vunpack.c.l.b16 %v271
    %v404 = vunpack.c.l.b16 %v272
    %v405 = vunpack.c.l.b16 %v273
    %v406 = vunpack.c.l.b16 %v274
    %v407 = vunpack.c.l.b16 %v275
    %v408 = vunpack.c.l.b16 %v276
    %v409 = vunpack.c.l.b16 %v277
    %v410 = vunpack.c.l.b16 %v278
    %v411 = vunpack.c.l.b16 %v279
    %v412 = vunpack.c.l.b16 %v280
    %v413 = vunpack.c.l.b16 %v281
    %v414 = vunpack.c.l.b16 %v282
    %v415 = vunpack.c.l.b16 %v283
    %v416 = vunpack.c.l.b16 %v284
    %v417 = vunpack.c.l.b16 %v285
    %v418 = vunpack.c.l.b16 %v286
    %v419 = vunpack.c.l.b16 %v287
    %v420 = vunpack.c.l.b16 %v288
    %v421 = vunpack.c.l.b16 %v289
    %v422 = vunpack.c.l.b16 %v290
    %v423 = vunpack.c.l.b16 %v291
    %v424 = vunpack.c.l.b16 %v292
    %v425 = vunpack.c.l.b16 %v293
    %v426 = vunpack.c.l.b16 %v294
    %v427 = vunpack.c.l.b16 %v295
    %v428 = vunpack.c.l.b16 %v296
    %v429 = vunpack.c.l.b16 %v297
    %v430 = vunpack.c.l.b16 %v298
    %v431 = vunpack.c.l.b16 %v299
    %v432 = vunpack.c.l.b16 %v300
    %v433 = vunpack.c.l.b16 %v301
    %v434 = vunpack.c.l.b16 %v302
    %v435 = vunpack.c.l.b16 %v303
    %v436 = vunpack.c.l.b16 %v304
    %v437 = vunpack.c.l.b16 %v305
    %v438 = vunpack.c.l.b16 %v306
    %v439 = vunpack.c.l.b16 %v307
    %v440 = vunpack.c.l.b16 %v308
    %v441 = vunpack.c.l.b16 %v309
    %v442 = vunpack.c.l.b16 %v310
    %v443 = vunpack.c.l.b16 %v311
    %v444 = vunpack.c.l.b16 %v312
    %v445 = vunpack.c.l.b16 %v313
    %v446 = vunpack.c.l.b16 %v314
    %v447 = vunpack.c.l.b16 %v315
    %v448 = vunpack.c.l.b16 %v316
    %v449 = vunpack.c.l.b16 %v317
    %v450 = vunpack.c.l.b16 %v318
    %v451 = vunpack.c.l.b16 %v319
    %v452 = vunpack.c.l.b16 %v320
    %v453 = vunpack.c.l.b16 %v321
    %v454 = vpack.c.b16 %v391, %v390
    %v455 = vpack.c.b16 %v393, %v392
    %v456 = vpack.c.b16 %v395, %v394
    %v457 = vpack.c.b16 %v397, %v396
    %v458 = vpack.c.b16 %v399, %v398
    %v459 = vpack.c.b16 %v401, %v400
    %v460 = vpack.c.b16 %v403, %v402
    %v461 = vpack.c.b16 %v405, %v404
    %v462 = vpack.c.b16 %v407, %v406
    %v463 = vpack.c.b16 %v409, %v408
    %v464 = vpack.c.b16 %v411, %v410
    %v465 = vpack.c.b16 %v413, %v412
    %v466 = vpack.c.b16 %v415, %v414
    %v467 = vpack.c.b16 %v417, %v416
    %v468 = vpack.c.b16 %v419, %v418
    %v469 = vpack.c.b16 %v421, %v420
    %v470 = vpack.c.b16 %v423, %v422
    %v471 = vpack.c.b16 %v425, %v424
    %v472 = vpack.c.b16 %v427, %v426
    %v473 = vpack.c.b16 %v429, %v428
    %v474 = vpack.c.b16 %v431, %v430
    %v475 = vpack.c.b16 %v433, %v432
    %v476 = vpack.c.b16 %v435, %v434
    %v477 = vpack.c.b16 %v437, %v436
    %v478 = vpack.c.b16 %v439, %v438
    %v479 = vpack.c.b16 %v441, %v440
    %v480 = vpack.c.b16 %v443, %v442
    %v481 = vpack.c.b16 %v445, %v444
    %v482 = vpack.c.b16 %v447, %v446
    %v483 = vpack.c.b16 %v449, %v448
    %v484 = vpack.c.b16 %v451, %v450
    %v485 = vpack.c.b16 %v453, %v452
    %518 = vmatpush.bf16.msra.mxu0 %v461
    %519 = vmatpush.bf16.msra.mxu0 %v460
    %520 = vmatpush.bf16.msra.mxu0 %v459
    %521 = vmatpush.bf16.msra.mxu0 %v458
    %522 = vmatpush.bf16.msra.mxu0 %v457
    %523 = vmatpush.bf16.msra.mxu0 %v456
    %524 = vmatpush.bf16.msra.mxu0 %v455
    %525 = vmatpush.bf16.msra.mxu0 %v454
    %526 = vmatmul.bf16.gmra.mxu0 %v254
    %v527 = vpop.f32.mrf.mxu0
    %v528 = vadd.f32 %v324, %v527
    %v529 = vpop.f32.mrf.mxu0
    %530 = vdwg.mxu0
    %531 = vmatpush.bf16.msra.mxu0 %v469
    %532 = vmatpush.bf16.msra.mxu0 %v468
    %533 = vmatpush.bf16.msra.mxu0 %v467
    %534 = vmatpush.bf16.msra.mxu0 %v466
    %535 = vmatpush.bf16.msra.mxu0 %v465
    %536 = vmatpush.bf16.msra.mxu0 %v464
    %537 = vmatpush.bf16.msra.mxu0 %v463
    %538 = vmatpush.bf16.msra.mxu0 %v462
    %539 = vmatmul.bf16.gmra.mxu0 %v255
    %v540 = vpop.f32.mrf.mxu0
    %v541 = vadd.f32 %v528, %v540
    %v542 = vpop.f32.mrf.mxu0
    %543 = vdwg.mxu0
    %544 = vmatpush.bf16.msra.mxu0 %v477
    %545 = vmatpush.bf16.msra.mxu0 %v476
    %546 = vmatpush.bf16.msra.mxu0 %v475
    %547 = vmatpush.bf16.msra.mxu0 %v474
    %548 = vmatpush.bf16.msra.mxu0 %v473
    %549 = vmatpush.bf16.msra.mxu0 %v472
    %550 = vmatpush.bf16.msra.mxu0 %v471
    %551 = vmatpush.bf16.msra.mxu0 %v470
    %552 = vmatmul.bf16.gmra.mxu0 %v256
    %v553 = vpop.f32.mrf.mxu0
    %v554 = vadd.f32 %v541, %v553
    %v555 = vpop.f32.mrf.mxu0
    %556 = vdwg.mxu0
    %557 = vmatpush.bf16.msra.mxu0 %v485
    %558 = vmatpush.bf16.msra.mxu0 %v484
    %559 = vmatpush.bf16.msra.mxu0 %v483
    %560 = vmatpush.bf16.msra.mxu0 %v482
    %561 = vmatpush.bf16.msra.mxu0 %v481
    %562 = vmatpush.bf16.msra.mxu0 %v480
    %563 = vmatpush.bf16.msra.mxu0 %v479
    %564 = vmatpush.bf16.msra.mxu0 %v478
    %565 = vmatmul.bf16.gmra.mxu0 %v257
    %v566 = vpop.f32.mrf.mxu0
    %v567 = vadd.f32 %v554, %v566
    %v568 = vpop.f32.mrf.mxu0
    %569 = vdwg.mxu0
    %v570 = vmax.f32 %v567, 0.0
    %v571 = vpack.c.bf16 %v570, %v570
    %v572 = vld [vmem:[#allocation7] sm:$0xf]
    %v573 = vld [vmem:[#allocation7 + $0x4] sm:$0xf]
    %v574 = vld [vmem:[#allocation7 + $0x8] sm:$0xf]
    %v575 = vld [vmem:[#allocation7 + $0xc] sm:$0xf]
    %v576 = vld [vmem:[#allocation7 + $0x10] sm:$0xf]
    %v577 = vld [vmem:[#allocation7 + $0x14] sm:$0xf]
    %v578 = vld [vmem:[#allocation7 + $0x18] sm:$0xf]
    %v579 = vld [vmem:[#allocation7 + $0x1c] sm:$0xf]
    %v580 = vld [vmem:[#allocation7 + $0x20] sm:$0xf]
    %v581 = vld [vmem:[#allocation7 + $0x24] sm:$0xf]
    %v582 = vld [vmem:[#allocation7 + $0x28] sm:$0xf]
    %v583 = vld [vmem:[#allocation7 + $0x2c] sm:$0xf]
    %v584 = vld [vmem:[#allocation7 + $0x30] sm:$0xf]
    %v585 = vld [vmem:[#allocation7 + $0x34] sm:$0xf]
    %v586 = vld [vmem:[#allocation7 + $0x38] sm:$0xf]
    %v587 = vld [vmem:[#allocation7 + $0x3c] sm:$0xf]
    %v588 = vld [vmem:[%s4] sm:$0x1]
    %v590 = vperm.slane %v588, 0
    %v608 = vunpack.c.l.b16 %v572
    %v609 = vunpack.c.l.b16 %v573
    %v610 = vunpack.c.l.b16 %v574
    %v611 = vunpack.c.l.b16 %v575
    %v612 = vunpack.c.l.b16 %v576
    %v613 = vunpack.c.l.b16 %v577
    %v614 = vunpack.c.l.b16 %v578
    %v615 = vunpack.c.l.b16 %v579
    %v616 = vunpack.c.l.b16 %v580
    %v617 = vunpack.c.l.b16 %v581
    %v618 = vunpack.c.l.b16 %v582
    %v619 = vunpack.c.l.b16 %v583
    %v620 = vunpack.c.l.b16 %v584
    %v621 = vunpack.c.l.b16 %v585
    %v622 = vunpack.c.l.b16 %v586
    %v623 = vunpack.c.l.b16 %v587
    %v624 = vpack.c.b16 %v609, %v608
    %v625 = vpack.c.b16 %v611, %v610
    %v626 = vpack.c.b16 %v613, %v612
    %v627 = vpack.c.b16 %v615, %v614
    %v628 = vpack.c.b16 %v617, %v616
    %v629 = vpack.c.b16 %v619, %v618
    %v630 = vpack.c.b16 %v621, %v620
    %v631 = vpack.c.b16 %v623, %v622
    %640 = vmatpush.bf16.msra.mxu0 %v631
    %641 = vmatpush.bf16.msra.mxu0 %v630
    %642 = vmatpush.bf16.msra.mxu0 %v629
    %643 = vmatpush.bf16.msra.mxu0 %v628
    %644 = vmatpush.bf16.msra.mxu0 %v627
    %645 = vmatpush.bf16.msra.mxu0 %v626
    %646 = vmatpush.bf16.msra.mxu0 %v625
    %647 = vmatpush.bf16.msra.mxu0 %v624
    %648 = vmatmul.bf16.gmra.mxu0 %v571
    %v649 = vpop.f32.mrf.mxu0
    %v650 = vadd.f32 %v590, %v649
    %v651 = vpop.f32.mrf.mxu0
    %652 = vdwg.mxu0
    %vm653 = vcmask 64512
    %v654 = vsel %vm653, %v650, -inf
    %655 = vmax.xlane.f32.xlu0 %v654
    %v656 = vpop.xlane.xlu0 %655
    %v657 = vsub.f32 %v650, %v656
    %v658 = vmul.f32 %v657, 1.442695
    %v659 = vpow.pop %v658
    %v660 = vsel %vm653, %v659, 0.0
    %661 = vadd.xlane.f32.xlu0 %v660
    %v662 = vpop.xlane.xlu0 %661
    %v663 = vrcp.pop %v662
    %v664 = vmul.f32 %v659, %v663
    %665 = vst.msk [vmem:[#allocation8] sm:$0xff] %vm653, %v664
    // Predicated region
    $region34: #{tpu_custom_call.1} parent=1 // pred_check
      _
    $region35: #{tpu_custom_call.1} parent=1 // pred_check_branch
      %667 = sbr.rel (0) target = $region37
    $region36: #{tpu_custom_call.1} parent=1 // pred_region
      %669 = vsyncadd [#allocation4], 0
      %s671 = sshll.u32 [#allocation8], 4
      %s672 = int_to_ptr.vmem [resolvable:$true] %s671
      %s673 = sshll.u32 %s5, 4
      %s674 = int_to_ptr.hbm [resolvable:$true] %s673
      %676 = dma.vmem_to_hbm [thread:$0]  %s672, 128, %s674, [#allocation4]
    $region37: #{tpu_custom_call.1} parent=1 // pred_fallthru
      _
    // Predicated region
    $region38: #{tpu_custom_call.1} parent=1 // pred_check
      _
    $region39: #{tpu_custom_call.1} parent=1 // pred_check_branch
      %678 = sbr.rel (0) target = $region41
    $region40: #{tpu_custom_call.1} parent=1 // pred_region
      %680 = dma.done [#allocation4], 128
    $region41: #{tpu_custom_call.1} parent=1 // pred_fallthru
      _
    %681 = vsyncpa [#allocation3], 1
    %682 = vsyncpa [#allocation6], 1
    %683 = vsyncpa [#allocation4], 1

</llo_original>
